<compile_context>
chip_gen: v6e
topology: v6e:2x2x1
jax: 0.10.0
libtpu: 0.0.40
codegen_flags: <defaults>
</compile_context>

<pallas_src>
import jax
import jax.numpy as jnp
from jax.experimental import pallas as pl
from jax.experimental.pallas import tpu as pltpu


def _pap_kernel(x_ref, w_ref, b_ref, q_ref, y_ref, a_ref):
    tB, S, D = x_ref.shape
    H = w_ref.shape[1]

    x = x_ref[...].astype(jnp.float32)      # [tB, S, D]
    w = w_ref[...].astype(jnp.float32)      # [D, H]
    b = b_ref[...].astype(jnp.float32)      # [1, H]
    q = q_ref[...].astype(jnp.float32)      # [tB, H]

    # Projection + tanh: flatten (tB, S) -> rows so a single lane-dense 2-D
    # matmul feeds the MXU ([tB*S, D] @ [D, H]).
    xf = x.reshape(tB * S, D)
    proj = jnp.tanh(
        jnp.dot(xf, w, preferred_element_type=jnp.float32) + b
    )                                        # [tB*S, H]
    proj3 = proj.reshape(tB, S, H)

    # Personalized attention scores: per-batch dot with the user query.
    scores = jnp.sum(proj3 * q[:, None, :], axis=-1)          # [tB, S]

    # Numerically-stable softmax over the sequence axis (f32).
    m = jnp.max(scores, axis=-1, keepdims=True)                # [tB, 1]
    e = jnp.exp(scores - m)                                    # [tB, S]
    denom = jnp.sum(e, axis=-1, keepdims=True)                 # [tB, 1]
    alpha = e * pl.reciprocal(denom, approx=True)              # [tB, S]

    # Attention-weighted sum over the sequence axis.
    y = jnp.sum(alpha[:, :, None] * x, axis=1)                 # [tB, D]

    y_ref[...] = y.astype(y_ref.dtype)
    a_ref[...] = alpha.astype(a_ref.dtype)


def personalized_attentive_pooling(vec_input, query_input, w_att, b_att, *, tile_b=8):
    """Fused forward pass.

    vec_input   : [B, S, D]   (value embeddings)
    query_input : [B, H]      (per-user/personalized query)
    w_att       : [D, H]      (nn.Linear weight, already transposed to x@W form)
    b_att       : [H]         (nn.Linear bias)
    returns (y [B, D], alpha [B, S])
    """
    B, S, D = vec_input.shape
    H = w_att.shape[1]
    dtype = vec_input.dtype

    # Pad batch to a multiple of the batch tile so every block keeps an
    # (8, 128)-friendly sublane extent and the grid stays > 1 when possible.
    Bp = pl.cdiv(B, tile_b) * tile_b
    if Bp != B:
        vec_input = jnp.pad(vec_input, ((0, Bp - B), (0, 0), (0, 0)))
        query_input = jnp.pad(query_input, ((0, Bp - B), (0, 0)))

    b2 = b_att.reshape(1, H)
    grid = (Bp // tile_b,)

    y, alpha = pl.pallas_call(
        _pap_kernel,
        out_shape=(
            jax.ShapeDtypeStruct((Bp, D), dtype),
            jax.ShapeDtypeStruct((Bp, S), dtype),
        ),
        grid=grid,
        in_specs=[
            # Activations: tile the batch axis, full (S, D) per tile.
            pl.BlockSpec((tile_b, S, D), lambda i: (i, 0, 0)),
            # Attention weight / bias: same block every step -> VMEM-resident.
            pl.BlockSpec((D, H), lambda i: (0, 0)),
            pl.BlockSpec((1, H), lambda i: (0, 0)),
            # Per-user query, tiled with the batch.
            pl.BlockSpec((tile_b, H), lambda i: (i, 0)),
        ],
        out_specs=(
            pl.BlockSpec((tile_b, D), lambda i: (i, 0)),
            pl.BlockSpec((tile_b, S), lambda i: (i, 0)),
        ),
        compiler_params=pltpu.CompilerParams(
            dimension_semantics=("parallel",),
        ),
    )(vec_input, w_att, b2, query_input)

    return y[:B], alpha[:B]


if __name__ == "__main__":
    key = jax.random.PRNGKey(0)
    # Small but lane/MXU-friendly shapes: D, H multiples of 128; S multiple of 8.
    B, S, D, H = 16, 16, 256, 128

    k1, k2, k3, k4 = jax.random.split(key, 4)
    vec_input = jax.random.normal(k1, (B, S, D), dtype=jnp.float32)
    query_input = jax.random.normal(k2, (B, H), dtype=jnp.float32)
    w_att = jax.random.normal(k3, (D, H), dtype=jnp.float32) * (1.0 / (D ** 0.5))
    b_att = jax.random.normal(k4, (H,), dtype=jnp.float32) * 0.1

    y, alpha = personalized_attentive_pooling(vec_input, query_input, w_att, b_att)
    y = jax.block_until_ready(y)
    alpha = jax.block_until_ready(alpha)

    # Pure-JAX reference (eval-mode forward: dropout == identity).
    proj_ref = jnp.tanh(jnp.einsum("bsd,dh->bsh", vec_input, w_att) + b_att)
    scores_ref = jnp.einsum("bsh,bh->bs", proj_ref, query_input)
    alpha_ref = jax.nn.softmax(scores_ref, axis=-1)
    y_ref = jnp.einsum("bs,bsd->bd", alpha_ref, vec_input)

    assert y.shape == (B, D), y.shape
    assert alpha.shape == (B, S), alpha.shape
    assert bool(jnp.allclose(alpha, alpha_ref, rtol=1e-2, atol=1e-2)), "alpha mismatch"
    assert bool(jnp.allclose(y, y_ref, rtol=1e-2, atol=1e-2)), "pooled output mismatch"

    print("KERNEL_OK")
</pallas_src>

<mosaic_0001>
module attributes {stable_mosaic.version = 11 : i64} {
  func.func @_pap_kernel(%arg0: i32, %arg1: memref<8x16x256xf32, #tpu.memory_space<vmem>>, %arg2: memref<256x128xf32, #tpu.memory_space<vmem>>, %arg3: memref<1x128xf32, #tpu.memory_space<vmem>>, %arg4: memref<8x128xf32, #tpu.memory_space<vmem>>, %arg5: memref<8x256xf32, #tpu.memory_space<vmem>>, %arg6: memref<8x16xf32, #tpu.memory_space<vmem>>) attributes {dimension_semantics = [#tpu.dimension_semantics<parallel>], iteration_bounds = array<i64: 2>, scalar_prefetch = 0 : i64, scratch_operands = 0 : i64, tpu.core_type = #tpu.core_type<tc>, window_params = [{transform_indices = @transform_0, window_bounds = array<i64: 8, 16, 256>}, {pipeline_mode = #tpu.pipeline_mode<synchronous>, transform_indices = @transform_1, window_bounds = array<i64: 256, 128>}, {pipeline_mode = #tpu.pipeline_mode<synchronous>, transform_indices = @transform_2, window_bounds = array<i64: 1, 128>}, {transform_indices = @transform_3, window_bounds = array<i64: 8, 128>}, {transform_indices = @transform_4, window_bounds = array<i64: 8, 256>}, {transform_indices = @transform_5, window_bounds = array<i64: 8, 16>}]} {
    %c0 = arith.constant 0 : index
    %c0_0 = arith.constant 0 : index
    %c0_1 = arith.constant 0 : index
    %0 = vector.load %arg1[%c0, %c0_0, %c0_1] : memref<8x16x256xf32, #tpu.memory_space<vmem>>, vector<8x16x256xf32>
    %c0_2 = arith.constant 0 : index
    %c0_3 = arith.constant 0 : index
    %1 = vector.load %arg2[%c0_2, %c0_3] : memref<256x128xf32, #tpu.memory_space<vmem>>, vector<256x128xf32>
    %c0_4 = arith.constant 0 : index
    %c0_5 = arith.constant 0 : index
    %2 = vector.load %arg3[%c0_4, %c0_5] : memref<1x128xf32, #tpu.memory_space<vmem>>, vector<1x128xf32>
    %c0_6 = arith.constant 0 : index
    %c0_7 = arith.constant 0 : index
    %3 = vector.load %arg4[%c0_6, %c0_7] : memref<8x128xf32, #tpu.memory_space<vmem>>, vector<8x128xf32>
    %4 = vector.shape_cast %0 : vector<8x16x256xf32> to vector<128x256xf32>
    %cst = arith.constant dense<0.000000e+00> : vector<128x128xf32>
    %5 = tpu.matmul %4, %1, %cst {dimension_numbers = #tpu.dot_dimension_numbers<[1], [0], [0], [1], [0, 0, 1, 1], [], []>} : vector<128x256xf32>, vector<256x128xf32>, vector<128x128xf32> -> vector<128x128xf32>
    %6 = vector.broadcast %2 : vector<1x128xf32> to vector<128x128xf32>
    %7 = arith.addf %5, %6 : vector<128x128xf32>
    %8 = math.tanh %7 : vector<128x128xf32>
    %9 = vector.shape_cast %8 : vector<128x128xf32> to vector<8x16x128xf32>
    %10 = vector.shape_cast %3 : vector<8x128xf32> to vector<8x1x128xf32>
    %11 = vector.broadcast %10 : vector<8x1x128xf32> to vector<8x16x128xf32>
    %12 = arith.mulf %9, %11 : vector<8x16x128xf32>
    %cst_8 = arith.constant dense<0.000000e+00> : vector<8x16xf32>
    %13 = vector.multi_reduction <add>, %12, %cst_8 [2] : vector<8x16x128xf32> to vector<8x16xf32>
    %cst_9 = arith.constant dense<0xFF800000> : vector<8xf32>
    %14 = vector.multi_reduction <maximumf>, %13, %cst_9 [1] : vector<8x16xf32> to vector<8xf32>
    %15 = vector.shape_cast %14 : vector<8xf32> to vector<8x1xf32>
    %16 = vector.broadcast %15 : vector<8x1xf32> to vector<8x16xf32>
    %17 = arith.subf %13, %16 : vector<8x16xf32>
    %18 = math.exp %17 : vector<8x16xf32>
    %cst_10 = arith.constant dense<0.000000e+00> : vector<8xf32>
    %19 = vector.multi_reduction <add>, %18, %cst_10 [1] : vector<8x16xf32> to vector<8xf32>
    %20 = vector.shape_cast %19 : vector<8xf32> to vector<8x1xf32>
    %21 = tpu.reciprocal %20 {approx = true} : vector<8x1xf32> -> vector<8x1xf32>
    %22 = vector.broadcast %21 : vector<8x1xf32> to vector<8x16xf32>
    %23 = arith.mulf %18, %22 : vector<8x16xf32>
    %24 = vector.shape_cast %23 : vector<8x16xf32> to vector<8x16x1xf32>
    %25 = vector.broadcast %24 : vector<8x16x1xf32> to vector<8x16x256xf32>
    %26 = arith.mulf %25, %0 : vector<8x16x256xf32>
    %cst_11 = arith.constant dense<0.000000e+00> : vector<8x256xf32>
    %27 = vector.multi_reduction <add>, %26, %cst_11 [1] : vector<8x16x256xf32> to vector<8x256xf32>
    %c0_12 = arith.constant 0 : index
    %c0_13 = arith.constant 0 : index
    %28 = vector.load %arg5[%c0_12, %c0_13] : memref<8x256xf32, #tpu.memory_space<vmem>>, vector<8x256xf32>
    tpu.vector_store %arg5[%c0_12, %c0_13], %27 {strides = array<i32>} : memref<8x256xf32, #tpu.memory_space<vmem>>, vector<8x256xf32>,
    %c0_14 = arith.constant 0 : index
    %c0_15 = arith.constant 0 : index
    %29 = vector.load %arg6[%c0_14, %c0_15] : memref<8x16xf32, #tpu.memory_space<vmem>>, vector<8x16xf32>
    tpu.vector_store %arg6[%c0_14, %c0_15], %23 {strides = array<i32>} : memref<8x16xf32, #tpu.memory_space<vmem>>, vector<8x16xf32>,
    return
  }
  func.func @transform_0(%arg0: i32) -> (i32, i32, i32) {
    %c0_i32 = arith.constant 0 : i32
    %c0_i32_0 = arith.constant 0 : i32
    %c0_i32_1 = arith.constant 0 : i32
    return %arg0, %c0_i32, %c0_i32_0 : i32, i32, i32
  }
  func.func @transform_1(%arg0: i32) -> (i32, i32) {
    %c0_i32 = arith.constant 0 : i32
    %c0_i32_0 = arith.constant 0 : i32
    %c0_i32_1 = arith.constant 0 : i32
    return %c0_i32, %c0_i32_0 : i32, i32
  }
  func.func @transform_2(%arg0: i32) -> (i32, i32) {
    %c0_i32 = arith.constant 0 : i32
    %c0_i32_0 = arith.constant 0 : i32
    %c0_i32_1 = arith.constant 0 : i32
    return %c0_i32, %c0_i32_0 : i32, i32
  }
  func.func @transform_3(%arg0: i32) -> (i32, i32) {
    %c0_i32 = arith.constant 0 : i32
    %c0_i32_0 = arith.constant 0 : i32
    return %arg0, %c0_i32 : i32, i32
  }
  func.func @transform_4(%arg0: i32) -> (i32, i32) {
    %c0_i32 = arith.constant 0 : i32
    %c0_i32_0 = arith.constant 0 : i32
    return %arg0, %c0_i32 : i32, i32
  }
  func.func @transform_5(%arg0: i32) -> (i32, i32) {
    %c0_i32 = arith.constant 0 : i32
    %c0_i32_0 = arith.constant 0 : i32
    return %arg0, %c0_i32 : i32, i32
  }
}

</mosaic_0001>

<llo_original>
// kernel: tpu_custom_call.1
$region0: #{tpu_custom_call.1}
  #allocation0 [shape = 'u32[]', space=smem, size = 0x4, offset = 0x4, fixed_abs, tag = 'smem constant byte address 0x4 - core index']
  #allocation1 [shape = 'u32[144,128]{1,0:T(1,128)}', space=vmem, size = 0x12000, scoped, tag = 'internal scratch']
  %s0 = inlined_call_operand.hbm [shape: f32[16,16,256], index: 0, kind: input, shape index: {}]
  %s1 = inlined_call_operand.hbm [shape: f32[256,128], index: 1, kind: input, shape index: {}]
  %s2 = inlined_call_operand.vmem [shape: f32[1,128], index: 2, kind: input, shape index: {}]
  %s3 = inlined_call_operand.hbm [shape: f32[16,128], index: 3, kind: input, shape index: {}]
  %s4 = inlined_call_operand.hbm [shape: f32[16,256], index: 4, kind: output, shape index: {0}]
  %s5 = inlined_call_operand.hbm [shape: f32[16,16], index: 5, kind: output, shape index: {1}]
  %6 = xla_tuple %s4, %s5
  %s7 = sld [smem:[#allocation0]]
  $region69: #{tpu_custom_call.1} parent=0
    _
  %s9 = ssub.s32 1, %s7
  %s10 = scalar_select 0, %s9, %s7
  $region1: #{tpu_custom_call.1} parent=0
    #allocation2 [shape = 'u8[262144]{0}', space=vmem, size = 0x40000, scoped, tag = 'input window, operand 0']
    #allocation3 [shape = 's32[2]{0}', space=sflag, size = 0x8, scoped, tag = 'scoped memory for tpu_custom_call.1']
    #allocation4 [shape = 's32[2]{0}', space=sflag, size = 0x8, scoped, tag = 'scoped memory for tpu_custom_call.1']
    #allocation5 [shape = 'u8[131072]{0}', space=vmem, size = 0x20000, scoped, tag = 'input window, operand 1, single buffered']
    #allocation6 [shape = 's32[1]{0}', space=sflag, size = 0x4, scoped, tag = 'scoped memory for tpu_custom_call.1']
    #allocation7 [shape = 'u8[8192]{0}', space=vmem, size = 0x2000, scoped, tag = 'input window, operand 3']
    #allocation8 [shape = 'u8[16384]{0}', space=vmem, size = 0x4000, scoped, tag = 'output window, operand 0']
    #allocation9 [shape = 'u8[8192]{0}', space=vmem, size = 0x2000, scoped, tag = 'output window, operand 1']
    #allocation10 [shape = 's32[2]{0}', space=sflag, size = 0x8, scoped, tag = 'scoped memory for tpu_custom_call.1']
    %11 = vsyncpa [#allocation3], 0
    %s12 = scalar_lea.sflag [#allocation3], 1
    %13 = vsyncpa %s12, 0
    %14 = vsyncpa [#allocation6], 0
    %15 = vsyncpa [#allocation4], 0
    %s16 = scalar_lea.sflag [#allocation4], 1
    %17 = vsyncpa %s16, 0
    %18 = vsyncpa [#allocation10], 0
    %s19 = scalar_lea.sflag [#allocation10], 1
    %20 = vsyncpa %s19, 0
    loop: start=0, step=1, limit=4
    $region2: #{tpu_custom_call.1} parent=1 // loop_pre_header
      _
    $region3: #{tpu_custom_call.1} parent=1 // loop_header
      %s22 = sphi 0, %s26
      %p23 = scmp.ge.s32.totalorder %s22, 4
      %s32 = sphi 0, %s34
      %s35 = sphi 0, %s32
      %s36 = sphi 0, %s35
      %s52 = sphi 0, %s36
      %s56 = sphi 0, %s56
      %s58 = sphi 0, %s56
      %s59 = sphi 0, %s58
      %s73 = sphi 0, %s59
      %s77 = sphi 0, %s77
      %s79 = sphi 0, %s77
      %s80 = sphi 0, %s79
      %s94 = sphi 0, %s80
      %s100 = sphi 0, %s102
      %s103 = sphi 0, %s100
      %s104 = sphi 0, %s103
      %s120 = sphi 0, %s104
      %s126 = sphi 0, %s128
      %s129 = sphi 0, %s126
      %s130 = sphi 0, %s129
      %s146 = sphi 0, %s130
      %s152 = sphi 0, %s154
      %s155 = sphi 0, %s152
      %s156 = sphi 0, %s155
      %s172 = sphi 0, %s156
    $region4: #{tpu_custom_call.1} parent=1 // loop_header_branch
      %25 = sbr.rel (%p23) target = $region8
    $region5: #{tpu_custom_call.1} parent=1 // loop_body
      %s27 = ssub.s32 %s22, 1
      %s28 = ssub.s32 %s22, 2
      %s29 = sadd.s32 %s22, 1
      %s30 = ssub.s32 %s22, %s29
      %p31 = scmp.eq.s32.totalorder %s30, 0
      %s33 = sadd.s32 %s32, 1
      %s34 = scalar_select %p31, %s32, %s33
      %p37 = pneg %p31
      %p38 = scmp.eq.s32.totalorder %s22, 1
      %p39 = por %p37, %p38
      %p40 = scmp.ne.s32.totalorder %s32, %s35
      %p41 = scmp.eq.s32.totalorder %s22, 0
      %p42 = por %p40, %p41
      %p43 = scmp.ne.s32.totalorder %s32, %s35
      %p44 = scmp.eq.s32.totalorder %s27, 1
      %p45 = por %p43, %p44
      %p46 = scmp.ne.s32.totalorder %s35, %s36
      %p47 = scmp.eq.s32.totalorder %s27, 0
      %p48 = por %p46, %p47
      %p49 = scmp.ne.s32.totalorder %s35, %s36
      %p50 = scmp.eq.s32.totalorder %s28, 1
      %p51 = por %p49, %p50
      %p53 = scmp.ne.s32.totalorder %s36, %s52
      %p54 = scmp.eq.s32.totalorder %s28, 0
      %p55 = por %p53, %p54
      %s57 = sadd.s32 %s56, 1
      %p60 = scmp.eq.s32.totalorder %s22, 1
      %p61 = scmp.ne.s32.totalorder %s56, %s58
      %p62 = scmp.eq.s32.totalorder %s22, 0
      %p63 = por %p61, %p62
      %p64 = scmp.ne.s32.totalorder %s56, %s58
      %p65 = scmp.eq.s32.totalorder %s27, 1
      %p66 = por %p64, %p65
      %p67 = scmp.ne.s32.totalorder %s58, %s59
      %p68 = scmp.eq.s32.totalorder %s27, 0
      %p69 = por %p67, %p68
      %p70 = scmp.ne.s32.totalorder %s58, %s59
      %p71 = scmp.eq.s32.totalorder %s28, 1
      %p72 = por %p70, %p71
      %p74 = scmp.ne.s32.totalorder %s59, %s73
      %p75 = scmp.eq.s32.totalorder %s28, 0
      %p76 = por %p74, %p75
      %s78 = sadd.s32 %s77, 1
      %p81 = scmp.eq.s32.totalorder %s22, 1
      %p82 = scmp.ne.s32.totalorder %s77, %s79
      %p83 = scmp.eq.s32.totalorder %s22, 0
      %p84 = por %p82, %p83
      %p85 = scmp.ne.s32.totalorder %s77, %s79
      %p86 = scmp.eq.s32.totalorder %s27, 1
      %p87 = por %p85, %p86
      %p88 = scmp.ne.s32.totalorder %s79, %s80
      %p89 = scmp.eq.s32.totalorder %s27, 0
      %p90 = por %p88, %p89
      %p91 = scmp.ne.s32.totalorder %s79, %s80
      %p92 = scmp.eq.s32.totalorder %s28, 1
      %p93 = por %p91, %p92
      %p95 = scmp.ne.s32.totalorder %s80, %s94
      %p96 = scmp.eq.s32.totalorder %s28, 0
      %p97 = por %p95, %p96
      %s98 = ssub.s32 %s22, %s29
      %p99 = scmp.eq.s32.totalorder %s98, 0
      %s101 = sadd.s32 %s100, 1
      %s102 = scalar_select %p99, %s100, %s101
      %p105 = pneg %p99
      %p106 = scmp.eq.s32.totalorder %s22, 1
      %p107 = por %p105, %p106
      %p108 = scmp.ne.s32.totalorder %s100, %s103
      %p109 = scmp.eq.s32.totalorder %s22, 0
      %p110 = por %p108, %p109
      %p111 = scmp.ne.s32.totalorder %s100, %s103
      %p112 = scmp.eq.s32.totalorder %s27, 1
      %p113 = por %p111, %p112
      %p114 = scmp.ne.s32.totalorder %s103, %s104
      %p115 = scmp.eq.s32.totalorder %s27, 0
      %p116 = por %p114, %p115
      %p117 = scmp.ne.s32.totalorder %s103, %s104
      %p118 = scmp.eq.s32.totalorder %s28, 1
      %p119 = por %p117, %p118
      %p121 = scmp.ne.s32.totalorder %s104, %s120
      %p122 = scmp.eq.s32.totalorder %s28, 0
      %p123 = por %p121, %p122
      %s124 = ssub.s32 %s22, %s29
      %p125 = scmp.eq.s32.totalorder %s124, 0
      %s127 = sadd.s32 %s126, 1
      %s128 = scalar_select %p125, %s126, %s127
      %p131 = pneg %p125
      %p132 = scmp.eq.s32.totalorder %s22, 1
      %p133 = por %p131, %p132
      %p134 = scmp.ne.s32.totalorder %s126, %s129
      %p135 = scmp.eq.s32.totalorder %s22, 0
      %p136 = por %p134, %p135
      %p137 = scmp.ne.s32.totalorder %s126, %s129
      %p138 = scmp.eq.s32.totalorder %s27, 1
      %p139 = por %p137, %p138
      %p140 = scmp.ne.s32.totalorder %s129, %s130
      %p141 = scmp.eq.s32.totalorder %s27, 0
      %p142 = por %p140, %p141
      %p143 = scmp.ne.s32.totalorder %s129, %s130
      %p144 = scmp.eq.s32.totalorder %s28, 1
      %p145 = por %p143, %p144
      %p147 = scmp.ne.s32.totalorder %s130, %s146
      %p148 = scmp.eq.s32.totalorder %s28, 0
      %p149 = por %p147, %p148
      %s150 = ssub.s32 %s22, %s29
      %p151 = scmp.eq.s32.totalorder %s150, 0
      %s153 = sadd.s32 %s152, 1
      %s154 = scalar_select %p151, %s152, %s153
      %p157 = pneg %p151
      %p158 = scmp.eq.s32.totalorder %s22, 1
      %p159 = por %p157, %p158
      %p160 = scmp.ne.s32.totalorder %s152, %s155
      %p161 = scmp.eq.s32.totalorder %s22, 0
      %p162 = por %p160, %p161
      %p163 = scmp.ne.s32.totalorder %s152, %s155
      %p164 = scmp.eq.s32.totalorder %s27, 1
      %p165 = por %p163, %p164
      %p166 = scmp.ne.s32.totalorder %s155, %s156
      %p167 = scmp.eq.s32.totalorder %s27, 0
      %p168 = por %p166, %p167
      %p169 = scmp.ne.s32.totalorder %s155, %s156
      %p170 = scmp.eq.s32.totalorder %s28, 1
      %p171 = por %p169, %p170
      %p173 = scmp.ne.s32.totalorder %s156, %s172
      %p174 = scmp.eq.s32.totalorder %s28, 0
      %p175 = por %p173, %p174
      %p176 = scmp.le.s32.totalorder 1, %s22
      %p177 = scmp.lt.s32.totalorder %s22, 3
      %p178 = pnand %p176, %p177
      %p179 = pneg %p178
      // Predicated region
      $region9: #{tpu_custom_call.1} parent=5 // pred_check
        _
      $region10: #{tpu_custom_call.1} parent=5 // pred_check_branch
        %181 = sbr.rel (%p178) target = $region12
      $region11: #{tpu_custom_call.1} parent=5 // pred_region
        %s182 = ssub.s32 %s22, 1
        // Predicated region
        $region13: #{tpu_custom_call.1} parent=11 // pred_check
          %p183 = pneg %p69
        $region14: #{tpu_custom_call.1} parent=11 // pred_check_branch
          %185 = sbr.rel (%p183) target = $region16
        $region15: #{tpu_custom_call.1} parent=11 // pred_region
          %s187 = ssub.s32 4096, 4096
          %188 = vsyncadd [#allocation6], %s187
          %s189 = sshll.u32 [#allocation5], 4
          %s190 = int_to_ptr.vmem [resolvable:$true] %s189
          %195 = dma.hbm_to_vmem [thread:$0]  %s1, 4096, %s190, [#allocation6], 128, 128, 8
        $region16: #{tpu_custom_call.1} parent=11 // pred_fallthru
          _
        // Predicated region
        $region17: #{tpu_custom_call.1} parent=11 // pred_check
          %p196 = pneg %p90
        $region18: #{tpu_custom_call.1} parent=11 // pred_check_branch
          %198 = sbr.rel (%p196) target = $region20
        $region19: #{tpu_custom_call.1} parent=11 // pred_region
          _
        $region20: #{tpu_custom_call.1} parent=11 // pred_fallthru
          _
      $region12: #{tpu_custom_call.1} parent=5 // pred_fallthru
        _
      %p199 = scmp.lt.s32.totalorder %s22, 2
      // Predicated region
      $region21: #{tpu_custom_call.1} parent=5 // pred_check
        %p200 = pneg %p199
      $region22: #{tpu_custom_call.1} parent=5 // pred_check_branch
        %202 = sbr.rel (%p200) target = $region24
      $region23: #{tpu_custom_call.1} parent=5 // pred_region
        // Predicated region
        $region25: #{tpu_custom_call.1} parent=23 // pred_check
          %p203 = pneg %p42
        $region26: #{tpu_custom_call.1} parent=23 // pred_check_branch
          %205 = sbr.rel (%p203) target = $region28
        $region27: #{tpu_custom_call.1} parent=23 // pred_region
          %s206 = sand.u32 %s22, 1
          %s207 = scalar_lea.sflag [#allocation3], %s206
          %s208 = sand.u32 %s32, 1
          %s209 = smul.addr %s208, 256
          %s210 = scalar_lea.vmem [#allocation2], %s209
          %s211 = smul.u32 8, %s22
          %s213 = ssub.s32 4096, 4096
          %214 = vsyncadd %s207, %s213
          %s215 = smul.addr %s211, 4
          %s216 = smul.addr %s215, 128
          %s217 = scalar_lea.hbm %s0, %s216
          %s218 = sshll.u32 %s210, 4
          %s219 = int_to_ptr.vmem [resolvable:$true] %s218
          %224 = dma.hbm_to_vmem [thread:$0]  %s217, 4096, %s219, %s207, 256, 256, 16
        $region28: #{tpu_custom_call.1} parent=23 // pred_fallthru
          _
        // Predicated region
        $region29: #{tpu_custom_call.1} parent=23 // pred_check
          %p225 = pneg %p110
        $region30: #{tpu_custom_call.1} parent=23 // pred_check_branch
          %227 = sbr.rel (%p225) target = $region32
        $region31: #{tpu_custom_call.1} parent=23 // pred_region
          %s228 = sand.u32 %s22, 1
          %s229 = scalar_lea.sflag [#allocation3], %s228
          %s230 = sand.u32 %s100, 1
          %s231 = smul.addr %s230, 8
          %s232 = scalar_lea.vmem [#allocation7], %s231
          %s234 = ssub.s32 128, 128
          %235 = vsyncadd %s229, %s234
          %s236 = smul.addr %s22, 128
          %s237 = scalar_lea.hbm %s3, %s236
          %s239 = sshll.u32 %s232, 4
          %s240 = int_to_ptr.vmem [resolvable:$true] %s239
          %242 = dma.hbm_to_vmem [thread:$0]  %s237, 128, %s240, %s229
        $region32: #{tpu_custom_call.1} parent=23 // pred_fallthru
          _
      $region24: #{tpu_custom_call.1} parent=5 // pred_fallthru
        _
      %p243 = scmp.le.s32.totalorder 1, %s22
      %p244 = scmp.lt.s32.totalorder %s22, 3
      %p245 = pnand %p243, %p244
      %p246 = pneg %p245
      // Predicated region
      $region33: #{tpu_custom_call.1} parent=5 // pred_check
        _
      $region34: #{tpu_custom_call.1} parent=5 // pred_check_branch
        %248 = sbr.rel (%p245) target = $region36
      $region35: #{tpu_custom_call.1} parent=5 // pred_region
        %s249 = ssub.s32 %s22, 1
        %s250 = sand.u32 %s27, 1
        %s251 = scalar_lea.sflag [#allocation3], %s250
        %s252 = sand.u32 %s35, 1
        %s253 = smul.addr %s252, 256
        %s254 = scalar_lea.vmem [#allocation2], %s253
        // Predicated region
        $region37: #{tpu_custom_call.1} parent=35 // pred_check
          %p255 = pneg %p48
        $region38: #{tpu_custom_call.1} parent=35 // pred_check_branch
          %257 = sbr.rel (%p255) target = $region40
        $region39: #{tpu_custom_call.1} parent=35 // pred_region
          %258 = dma.done %s251, 4096
        $region40: #{tpu_custom_call.1} parent=35 // pred_fallthru
          _
        // Predicated region
        $region41: #{tpu_custom_call.1} parent=35 // pred_check
          %p259 = pneg %p69
        $region42: #{tpu_custom_call.1} parent=35 // pred_check_branch
          %261 = sbr.rel (%p259) target = $region44
        $region43: #{tpu_custom_call.1} parent=35 // pred_region
          %262 = dma.done [#allocation6], 4096
        $region44: #{tpu_custom_call.1} parent=35 // pred_fallthru
          _
        %s263 = sand.u32 %s27, 1
        %s264 = scalar_lea.sflag [#allocation3], %s263
        %s265 = sand.u32 %s103, 1
        %s266 = smul.addr %s265, 8
        %s267 = scalar_lea.vmem [#allocation7], %s266
        // Predicated region
        $region45: #{tpu_custom_call.1} parent=35 // pred_check
          %p268 = pneg %p116
        $region46: #{tpu_custom_call.1} parent=35 // pred_check_branch
          %270 = sbr.rel (%p268) target = $region48
        $region47: #{tpu_custom_call.1} parent=35 // pred_region
          %271 = dma.done %s264, 128
        $region48: #{tpu_custom_call.1} parent=35 // pred_fallthru
          _
        %s272 = sand.u32 %s27, 1
        %s273 = scalar_lea.sflag [#allocation3], %s272
        %s274 = sand.u32 %s35, 1
        %s275 = smul.addr %s274, 256
        %s276 = scalar_lea.vmem [#allocation2], %s275
        %p277 = pneg %p48
        %p278 = pneg %p45
        %p279 = pneg %p69
        %p280 = pneg %p66
        %p281 = pneg %p90
        %p282 = pneg %p87
        %s283 = sand.u32 %s27, 1
        %s284 = scalar_lea.sflag [#allocation3], %s283
        %s285 = sand.u32 %s103, 1
        %s286 = smul.addr %s285, 8
        %s287 = scalar_lea.vmem [#allocation7], %s286
        %p288 = pneg %p116
        %p289 = pneg %p113
        %p290 = pneg %p142
        %p291 = pneg %p139
        %s292 = sand.u32 %s129, 1
        %s293 = scalar_lea.sflag [#allocation4], %s292
        %s294 = sand.u32 %s129, 1
        %s295 = smul.addr %s294, 16
        %s296 = scalar_lea.vmem [#allocation8], %s295
        %p297 = pneg %p168
        %p298 = pneg %p165
        %s299 = sand.u32 %s155, 1
        %s300 = scalar_lea.sflag [#allocation10], %s299
        %s301 = sand.u32 %s155, 1
        %s302 = smul.addr %s301, 8
        %s303 = scalar_lea.vmem [#allocation9], %s302
        %s304 = smul.u32 8, %s27
        %v305 = vld [vmem:[%s254] sm:$0xff]
        %v306 = vld [vmem:[%s254 + $0x8] sm:$0xff]
        %v307 = vld [vmem:[%s254 + $0x10] sm:$0xff]
        %v308 = vld [vmem:[%s254 + $0x18] sm:$0xff]
        %v309 = vld [vmem:[%s254 + $0x20] sm:$0xff]
        %v310 = vld [vmem:[%s254 + $0x28] sm:$0xff]
        %v311 = vld [vmem:[%s254 + $0x30] sm:$0xff]
        %v312 = vld [vmem:[%s254 + $0x38] sm:$0xff]
        %v313 = vld [vmem:[%s254 + $0x40] sm:$0xff]
        %v314 = vld [vmem:[%s254 + $0x48] sm:$0xff]
        %v315 = vld [vmem:[%s254 + $0x50] sm:$0xff]
        %v316 = vld [vmem:[%s254 + $0x58] sm:$0xff]
        %v317 = vld [vmem:[%s254 + $0x60] sm:$0xff]
        %v318 = vld [vmem:[%s254 + $0x68] sm:$0xff]
        %v319 = vld [vmem:[%s254 + $0x70] sm:$0xff]
        %v320 = vld [vmem:[%s254 + $0x78] sm:$0xff]
        %v321 = vld [vmem:[%s254 + $0x80] sm:$0xff]
        %v322 = vld [vmem:[%s254 + $0x88] sm:$0xff]
        %v323 = vld [vmem:[%s254 + $0x90] sm:$0xff]
        %v324 = vld [vmem:[%s254 + $0x98] sm:$0xff]
        %v325 = vld [vmem:[%s254 + $0xa0] sm:$0xff]
        %v326 = vld [vmem:[%s254 + $0xa8] sm:$0xff]
        %v327 = vld [vmem:[%s254 + $0xb0] sm:$0xff]
        %v328 = vld [vmem:[%s254 + $0xb8] sm:$0xff]
        %v329 = vld [vmem:[%s254 + $0xc0] sm:$0xff]
        %v330 = vld [vmem:[%s254 + $0xc8] sm:$0xff]
        %v331 = vld [vmem:[%s254 + $0xd0] sm:$0xff]
        %v332 = vld [vmem:[%s254 + $0xd8] sm:$0xff]
        %v333 = vld [vmem:[%s254 + $0xe0] sm:$0xff]
        %v334 = vld [vmem:[%s254 + $0xe8] sm:$0xff]
        %v335 = vld [vmem:[%s254 + $0xf0] sm:$0xff]
        %v336 = vld [vmem:[%s254 + $0xf8] sm:$0xff]
        %v337 = vld [vmem:[#allocation5] sm:$0xff]
        %v338 = vld [vmem:[#allocation5 + $0x8] sm:$0xff]
        %v339 = vld [vmem:[#allocation5 + $0x10] sm:$0xff]
        %v340 = vld [vmem:[#allocation5 + $0x18] sm:$0xff]
        %v341 = vld [vmem:[#allocation5 + $0x20] sm:$0xff]
        %v342 = vld [vmem:[#allocation5 + $0x28] sm:$0xff]
        %v343 = vld [vmem:[#allocation5 + $0x30] sm:$0xff]
        %v344 = vld [vmem:[#allocation5 + $0x38] sm:$0xff]
        %v345 = vld [vmem:[#allocation5 + $0x40] sm:$0xff]
        %v346 = vld [vmem:[#allocation5 + $0x48] sm:$0xff]
        %v347 = vld [vmem:[#allocation5 + $0x50] sm:$0xff]
        %v348 = vld [vmem:[#allocation5 + $0x58] sm:$0xff]
        %v349 = vld [vmem:[#allocation5 + $0x60] sm:$0xff]
        %v350 = vld [vmem:[#allocation5 + $0x68] sm:$0xff]
        %v351 = vld [vmem:[#allocation5 + $0x70] sm:$0xff]
        %v352 = vld [vmem:[#allocation5 + $0x78] sm:$0xff]
        %v353 = vld [vmem:[#allocation5 + $0x80] sm:$0xff]
        %v354 = vld [vmem:[#allocation5 + $0x88] sm:$0xff]
        %v355 = vld [vmem:[#allocation5 + $0x90] sm:$0xff]
        %v356 = vld [vmem:[#allocation5 + $0x98] sm:$0xff]
        %v357 = vld [vmem:[#allocation5 + $0xa0] sm:$0xff]
        %v358 = vld [vmem:[#allocation5 + $0xa8] sm:$0xff]
        %v359 = vld [vmem:[#allocation5 + $0xb0] sm:$0xff]
        %v360 = vld [vmem:[#allocation5 + $0xb8] sm:$0xff]
        %v361 = vld [vmem:[#allocation5 + $0xc0] sm:$0xff]
        %v362 = vld [vmem:[#allocation5 + $0xc8] sm:$0xff]
        %v363 = vld [vmem:[#allocation5 + $0xd0] sm:$0xff]
        %v364 = vld [vmem:[#allocation5 + $0xd8] sm:$0xff]
        %v365 = vld [vmem:[#allocation5 + $0xe0] sm:$0xff]
        %v366 = vld [vmem:[#allocation5 + $0xe8] sm:$0xff]
        %v367 = vld [vmem:[#allocation5 + $0xf0] sm:$0xff]
        %v368 = vld [vmem:[#allocation5 + $0xf8] sm:$0xff]
        %v369 = vld [vmem:[%s2] sm:$0x1]
        %v370 = vld [vmem:[%s267] sm:$0xff]
        %v372 = vlaneseq
        %v373 = vshrl.u32 %v372, 7
        %v374 = vsub.s32 0, %v373
        %v375 = vrot.slane %v369, %v374
        %377 = vmatprep.subr.mxu0 0.0
        %378 = vmatpush1.msra.mxu0 %v352
        %379 = vmatprep.subr.mxu0 0.0
        %380 = vmatpush1.msra.mxu0 %v351
        %381 = vmatprep.subr.mxu0 0.0
        %382 = vmatpush1.msra.mxu0 %v350
        %383 = vmatprep.subr.mxu0 0.0
        %384 = vmatpush1.msra.mxu0 %v349
        %385 = vmatprep.subr.mxu0 0.0
        %386 = vmatpush1.msra.mxu0 %v348
        %387 = vmatprep.subr.mxu0 0.0
        %388 = vmatpush1.msra.mxu0 %v347
        %389 = vmatprep.subr.mxu0 0.0
        %390 = vmatpush1.msra.mxu0 %v346
        %391 = vmatprep.subr.mxu0 0.0
        %392 = vmatpush1.msra.mxu0 %v345
        %393 = vmatprep.subr.mxu0 0.0
        %394 = vmatpush1.msra.mxu0 %v344
        %395 = vmatprep.subr.mxu0 0.0
        %396 = vmatpush1.msra.mxu0 %v343
        %397 = vmatprep.subr.mxu0 0.0
        %398 = vmatpush1.msra.mxu0 %v342
        %399 = vmatprep.subr.mxu0 0.0
        %400 = vmatpush1.msra.mxu0 %v341
        %401 = vmatprep.subr.mxu0 0.0
        %402 = vmatpush1.msra.mxu0 %v340
        %403 = vmatprep.subr.mxu0 0.0
        %404 = vmatpush1.msra.mxu0 %v339
        %405 = vmatprep.subr.mxu0 0.0
        %406 = vmatpush1.msra.mxu0 %v338
        %407 = vmatprep.subr.mxu0 0.0
        %408 = vmatpush1.msra.mxu0 %v337
        %409 = vmatprep.subr.mxu0 0.0
        %410 = vmatpush2.msra.mxu0 %v368
        %411 = vmatprep.subr.mxu0 0.0
        %412 = vmatpush2.msra.mxu0 %v367
        %413 = vmatprep.subr.mxu0 0.0
        %414 = vmatpush2.msra.mxu0 %v366
        %415 = vmatprep.subr.mxu0 0.0
        %416 = vmatpush2.msra.mxu0 %v365
        %417 = vmatprep.subr.mxu0 0.0
        %418 = vmatpush2.msra.mxu0 %v364
        %419 = vmatprep.subr.mxu0 0.0
        %420 = vmatpush2.msra.mxu0 %v363
        %421 = vmatprep.subr.mxu0 0.0
        %422 = vmatpush2.msra.mxu0 %v362
        %423 = vmatprep.subr.mxu0 0.0
        %424 = vmatpush2.msra.mxu0 %v361
        %425 = vmatprep.subr.mxu0 0.0
        %426 = vmatpush2.msra.mxu0 %v360
        %427 = vmatprep.subr.mxu0 0.0
        %428 = vmatpush2.msra.mxu0 %v359
        %429 = vmatprep.subr.mxu0 0.0
        %430 = vmatpush2.msra.mxu0 %v358
        %431 = vmatprep.subr.mxu0 0.0
        %432 = vmatpush2.msra.mxu0 %v357
        %433 = vmatprep.subr.mxu0 0.0
        %434 = vmatpush2.msra.mxu0 %v356
        %435 = vmatprep.subr.mxu0 0.0
        %436 = vmatpush2.msra.mxu0 %v355
        %437 = vmatprep.subr.mxu0 0.0
        %438 = vmatpush2.msra.mxu0 %v354
        %439 = vmatprep.subr.mxu0 0.0
        %440 = vmatpush2.msra.mxu0 %v353
        %441 = vmatprep.mubr.f32.mxu0 %v306
        %442 = vmatmul.mubr.f32.gmra.mxu0 %v305
        %v443 = vpop.f32.mrf.mxu0
        %v444 = vadd.f32 %v375, %v443
        %v445 = vpop.f32.mrf.mxu0
        %446 = vmatprep.mubr.f32.mxu0 %v308
        %447 = vmatmul.mubr.f32.gmra.mxu0 %v307
        %v448 = vpop.f32.mrf.mxu0
        %v449 = vadd.f32 %v375, %v448
        %v450 = vpop.f32.mrf.mxu0
        %451 = vmatprep.mubr.f32.mxu0 %v310
        %452 = vmatmul.mubr.f32.gmra.mxu0 %v309
        %v453 = vpop.f32.mrf.mxu0
        %v454 = vadd.f32 %v375, %v453
        %v455 = vpop.f32.mrf.mxu0
        %456 = vmatprep.mubr.f32.mxu0 %v312
        %457 = vmatmul.mubr.f32.gmra.mxu0 %v311
        %v458 = vpop.f32.mrf.mxu0
        %v459 = vadd.f32 %v375, %v458
        %v460 = vpop.f32.mrf.mxu0
        %461 = vmatprep.mubr.f32.mxu0 %v314
        %462 = vmatmul.mubr.f32.gmra.mxu0 %v313
        %v463 = vpop.f32.mrf.mxu0
        %v464 = vadd.f32 %v375, %v463
        %v465 = vpop.f32.mrf.mxu0
        %466 = vmatprep.mubr.f32.mxu0 %v316
        %467 = vmatmul.mubr.f32.gmra.mxu0 %v315
        %v468 = vpop.f32.mrf.mxu0
        %v469 = vadd.f32 %v375, %v468
        %v470 = vpop.f32.mrf.mxu0
        %471 = vmatprep.mubr.f32.mxu0 %v318
        %472 = vmatmul.mubr.f32.gmra.mxu0 %v317
        %v473 = vpop.f32.mrf.mxu0
        %v474 = vadd.f32 %v375, %v473
        %v475 = vpop.f32.mrf.mxu0
        %476 = vmatprep.mubr.f32.mxu0 %v320
        %477 = vmatmul.mubr.f32.gmra.mxu0 %v319
        %v478 = vpop.f32.mrf.mxu0
        %v479 = vadd.f32 %v375, %v478
        %v480 = vpop.f32.mrf.mxu0
        %481 = vmatprep.mubr.f32.mxu0 %v322
        %482 = vmatmul.mubr.f32.gmra.mxu0 %v321
        %v483 = vpop.f32.mrf.mxu0
        %v484 = vadd.f32 %v375, %v483
        %v485 = vpop.f32.mrf.mxu0
        %486 = vmatprep.mubr.f32.mxu0 %v324
        %487 = vmatmul.mubr.f32.gmra.mxu0 %v323
        %v488 = vpop.f32.mrf.mxu0
        %v489 = vadd.f32 %v375, %v488
        %v490 = vpop.f32.mrf.mxu0
        %491 = vmatprep.mubr.f32.mxu0 %v326
        %492 = vmatmul.mubr.f32.gmra.mxu0 %v325
        %v493 = vpop.f32.mrf.mxu0
        %v494 = vadd.f32 %v375, %v493
        %v495 = vpop.f32.mrf.mxu0
        %496 = vmatprep.mubr.f32.mxu0 %v328
        %497 = vmatmul.mubr.f32.gmra.mxu0 %v327
        %v498 = vpop.f32.mrf.mxu0
        %v499 = vadd.f32 %v375, %v498
        %v500 = vpop.f32.mrf.mxu0
        %501 = vmatprep.mubr.f32.mxu0 %v330
        %502 = vmatmul.mubr.f32.gmra.mxu0 %v329
        %v503 = vpop.f32.mrf.mxu0
        %v504 = vadd.f32 %v375, %v503
        %v505 = vpop.f32.mrf.mxu0
        %506 = vmatprep.mubr.f32.mxu0 %v332
        %507 = vmatmul.mubr.f32.gmra.mxu0 %v331
        %v508 = vpop.f32.mrf.mxu0
        %v509 = vadd.f32 %v375, %v508
        %v510 = vpop.f32.mrf.mxu0
        %511 = vmatprep.mubr.f32.mxu0 %v334
        %512 = vmatmul.mubr.f32.gmra.mxu0 %v333
        %v513 = vpop.f32.mrf.mxu0
        %v514 = vadd.f32 %v375, %v513
        %v515 = vpop.f32.mrf.mxu0
        %516 = vmatprep.mubr.f32.mxu0 %v336
        %517 = vmatmul.mubr.f32.gmra.mxu0 %v335
        %v518 = vpop.f32.mrf.mxu0
        %v519 = vadd.f32 %v375, %v518
        %v520 = vpop.f32.mrf.mxu0
        %521 = vdwg.mxu0
        %v522 = vtanh.pop %v444
        %v523 = vtanh.pop %v449
        %v524 = vtanh.pop %v454
        %v525 = vtanh.pop %v459
        %v526 = vtanh.pop %v464
        %v527 = vtanh.pop %v469
        %v528 = vtanh.pop %v474
        %v529 = vtanh.pop %v479
        %v530 = vtanh.pop %v484
        %v531 = vtanh.pop %v489
        %v532 = vtanh.pop %v494
        %v533 = vtanh.pop %v499
        %v534 = vtanh.pop %v504
        %v535 = vtanh.pop %v509
        %v536 = vtanh.pop %v514
        %v537 = vtanh.pop %v519
        %v539 = vcombine.high %v370, %v370
        %v541 = vunpack.c.l.s4 1966171168
        %v542 = vunpack.c.0.s8 %v541
        %v543 = vlaneseq
        %v544 = vshrl.u32 %v543, 7
        %v545 = vsub.s32 %v542, %v544
        %v546 = vrot.slane %v370, %v545
        %v548 = vunpack.c.l.s4 1966171168
        %v549 = vunpack.c.0.s8 %v548
        %v550 = vlaneseq
        %v551 = vshrl.u32 %v550, 7
        %v552 = vsub.s32 %v549, %v551
        %v553 = vrot.slane %v539, %v552
        %v554 = vcombine.high %v546, %v546
        %v555 = vcombine.high %v553, %v553
        %v557 = vunpack.c.l.s4 1966171168
        %v558 = vunpack.c.0.s8 %v557
        %v559 = vlaneseq
        %v560 = vshrl.u32 %v559, 7
        %v561 = vsub.s32 %v558, %v560
        %v562 = vrot.slane %v546, %v561
        %v564 = vunpack.c.l.s4 1966171168
        %v565 = vunpack.c.0.s8 %v564
        %v566 = vlaneseq
        %v567 = vshrl.u32 %v566, 7
        %v568 = vsub.s32 %v565, %v567
        %v569 = vrot.slane %v553, %v568
        %v571 = vunpack.c.l.s4 1966171168
        %v572 = vunpack.c.0.s8 %v571
        %v573 = vlaneseq
        %v574 = vshrl.u32 %v573, 7
        %v575 = vsub.s32 %v572, %v574
        %v576 = vrot.slane %v554, %v575
        %v578 = vunpack.c.l.s4 1966171168
        %v579 = vunpack.c.0.s8 %v578
        %v580 = vlaneseq
        %v581 = vshrl.u32 %v580, 7
        %v582 = vsub.s32 %v579, %v581
        %v583 = vrot.slane %v555, %v582
        %v584 = vcombine.high %v562, %v562
        %v585 = vcombine.high %v569, %v569
        %v586 = vcombine.high %v576, %v576
        %v587 = vcombine.high %v583, %v583
        %v588 = vlaneseq
        %v589 = vshrl.u32 %v588, 7
        %v590 = vsub.s32 0, %v589
        %v591 = vrot.slane %v562, %v590
        %v592 = vlaneseq
        %v593 = vshrl.u32 %v592, 7
        %v594 = vsub.s32 0, %v593
        %v595 = vrot.slane %v576, %v594
        %v596 = vlaneseq
        %v597 = vshrl.u32 %v596, 7
        %v598 = vsub.s32 0, %v597
        %v599 = vrot.slane %v584, %v598
        %v600 = vlaneseq
        %v601 = vshrl.u32 %v600, 7
        %v602 = vsub.s32 0, %v601
        %v603 = vrot.slane %v586, %v602
        %v604 = vlaneseq
        %v605 = vshrl.u32 %v604, 7
        %v606 = vsub.s32 0, %v605
        %v607 = vrot.slane %v569, %v606
        %v608 = vlaneseq
        %v609 = vshrl.u32 %v608, 7
        %v610 = vsub.s32 0, %v609
        %v611 = vrot.slane %v583, %v610
        %v612 = vlaneseq
        %v613 = vshrl.u32 %v612, 7
        %v614 = vsub.s32 0, %v613
        %v615 = vrot.slane %v585, %v614
        %v616 = vlaneseq
        %v617 = vshrl.u32 %v616, 7
        %v618 = vsub.s32 0, %v617
        %v619 = vrot.slane %v587, %v618
        %v628 = vmul.f32 %v522, %v591
        %v629 = vmul.f32 %v523, %v591
        %v630 = vmul.f32 %v524, %v595
        %v631 = vmul.f32 %v525, %v595
        %v632 = vmul.f32 %v526, %v599
        %v633 = vmul.f32 %v527, %v599
        %v634 = vmul.f32 %v528, %v603
        %v635 = vmul.f32 %v529, %v603
        %v636 = vmul.f32 %v530, %v607
        %v637 = vmul.f32 %v531, %v607
        %v638 = vmul.f32 %v532, %v611
        %v639 = vmul.f32 %v533, %v611
        %v640 = vmul.f32 %v534, %v615
        %v641 = vmul.f32 %v535, %v615
        %v642 = vmul.f32 %v536, %v619
        %v643 = vmul.f32 %v537, %v619
        %644 = vadd.xlane.f32.xlu0 %v628
        %v645 = vpop.xlane.xlu0 %644
        %646 = vadd.xlane.f32.xlu0 %v629
        %v647 = vpop.xlane.xlu0 %646
        %648 = vadd.xlane.f32.xlu0 %v630
        %v649 = vpop.xlane.xlu0 %648
        %650 = vadd.xlane.f32.xlu0 %v631
        %v651 = vpop.xlane.xlu0 %650
        %652 = vadd.xlane.f32.xlu0 %v632
        %v653 = vpop.xlane.xlu0 %652
        %654 = vadd.xlane.f32.xlu0 %v633
        %v655 = vpop.xlane.xlu0 %654
        %656 = vadd.xlane.f32.xlu0 %v634
        %v657 = vpop.xlane.xlu0 %656
        %658 = vadd.xlane.f32.xlu0 %v635
        %v659 = vpop.xlane.xlu0 %658
        %660 = vadd.xlane.f32.xlu0 %v636
        %v661 = vpop.xlane.xlu0 %660
        %662 = vadd.xlane.f32.xlu0 %v637
        %v663 = vpop.xlane.xlu0 %662
        %664 = vadd.xlane.f32.xlu0 %v638
        %v665 = vpop.xlane.xlu0 %664
        %666 = vadd.xlane.f32.xlu0 %v639
        %v667 = vpop.xlane.xlu0 %666
        %668 = vadd.xlane.f32.xlu0 %v640
        %v669 = vpop.xlane.xlu0 %668
        %670 = vadd.xlane.f32.xlu0 %v641
        %v671 = vpop.xlane.xlu0 %670
        %672 = vadd.xlane.f32.xlu0 %v642
        %v673 = vpop.xlane.xlu0 %672
        %674 = vadd.xlane.f32.xlu0 %v643
        %v675 = vpop.xlane.xlu0 %674
        %v692 = vlaneseq
        %v693 = vand.u32 %v692, 127
        %v694 = vlaneseq
        %v695 = vshrl.u32 %v694, 7
        %v696 = vsub.s32 %v693, %v695
        %v697 = vrot.slane %v645, %v696
        %v698 = vadd.s32 %v693, 4294967288
        %v699 = vlaneseq
        %v700 = vshrl.u32 %v699, 7
        %v701 = vsub.s32 %v698, %v700
        %v702 = vrot.slane %v647, %v701
        %vm703 = vcmask 130112
        %v704 = vsel %vm703, %v702, %v697
        %v705 = vlaneseq
        %v706 = vshrl.u32 %v705, 7
        %v707 = vsub.s32 %v693, %v706
        %v708 = vrot.slane %v649, %v707
        %v709 = vlaneseq
        %v710 = vshrl.u32 %v709, 7
        %v711 = vsub.s32 %v698, %v710
        %v712 = vrot.slane %v651, %v711
        %v713 = vsel %vm703, %v712, %v708
        %v714 = vlaneseq
        %v715 = vshrl.u32 %v714, 7
        %v716 = vsub.s32 %v693, %v715
        %v717 = vrot.slane %v653, %v716
        %v718 = vlaneseq
        %v719 = vshrl.u32 %v718, 7
        %v720 = vsub.s32 %v698, %v719
        %v721 = vrot.slane %v655, %v720
        %v722 = vsel %vm703, %v721, %v717
        %v723 = vlaneseq
        %v724 = vshrl.u32 %v723, 7
        %v725 = vsub.s32 %v693, %v724
        %v726 = vrot.slane %v657, %v725
        %v727 = vlaneseq
        %v728 = vshrl.u32 %v727, 7
        %v729 = vsub.s32 %v698, %v728
        %v730 = vrot.slane %v659, %v729
        %v731 = vsel %vm703, %v730, %v726
        %v732 = vlaneseq
        %v733 = vshrl.u32 %v732, 7
        %v734 = vsub.s32 %v693, %v733
        %v735 = vrot.slane %v661, %v734
        %v736 = vlaneseq
        %v737 = vshrl.u32 %v736, 7
        %v738 = vsub.s32 %v698, %v737
        %v739 = vrot.slane %v663, %v738
        %v740 = vsel %vm703, %v739, %v735
        %v741 = vlaneseq
        %v742 = vshrl.u32 %v741, 7
        %v743 = vsub.s32 %v693, %v742
        %v744 = vrot.slane %v665, %v743
        %v745 = vlaneseq
        %v746 = vshrl.u32 %v745, 7
        %v747 = vsub.s32 %v698, %v746
        %v748 = vrot.slane %v667, %v747
        %v749 = vsel %vm703, %v748, %v744
        %v750 = vlaneseq
        %v751 = vshrl.u32 %v750, 7
        %v752 = vsub.s32 %v693, %v751
        %v753 = vrot.slane %v669, %v752
        %v754 = vlaneseq
        %v755 = vshrl.u32 %v754, 7
        %v756 = vsub.s32 %v698, %v755
        %v757 = vrot.slane %v671, %v756
        %v758 = vsel %vm703, %v757, %v753
        %v759 = vlaneseq
        %v760 = vshrl.u32 %v759, 7
        %v761 = vsub.s32 %v693, %v760
        %v762 = vrot.slane %v673, %v761
        %v763 = vlaneseq
        %v764 = vshrl.u32 %v763, 7
        %v765 = vsub.s32 %v698, %v764
        %v766 = vrot.slane %v675, %v765
        %v767 = vsel %vm703, %v766, %v762
        %vm768 = vcmask 1041409
        %v769 = vsel %vm768, %v713, %v704
        %vm770 = vcmask 1042434
        %v771 = vsel %vm770, %v722, %v769
        %vm772 = vcmask 1043459
        %v773 = vsel %vm772, %v731, %v771
        %vm774 = vcmask 1044484
        %v775 = vsel %vm774, %v740, %v773
        %vm776 = vcmask 1045509
        %v777 = vsel %vm776, %v749, %v775
        %vm778 = vcmask 1046534
        %v779 = vsel %vm778, %v758, %v777
        %vm780 = vcmask 1047559
        %v781 = vsel %vm780, %v767, %v779
        %vm783 = vcmask 130048
        %v784 = vsel %vm783, %v781, -inf
        %785 = vmax.xlane.f32.xlu0 %v784
        %v786 = vpop.xlane.xlu0 %785
        %v788 = vlaneseq
        %v789 = vshrl.u32 %v788, 7
        %v790 = vsub.s32 0, %v789
        %v791 = vrot.slane %v786, %v790
        %v792 = vlaneseq
        %v793 = vshrl.u32 %v792, 7
        %v794 = vsub.s32 1, %v793
        %v795 = vrot.slane %v786, %v794
        %v796 = vlaneseq
        %v797 = vshrl.u32 %v796, 7
        %v798 = vsub.s32 2, %v797
        %v799 = vrot.slane %v786, %v798
        %v800 = vlaneseq
        %v801 = vshrl.u32 %v800, 7
        %v802 = vsub.s32 3, %v801
        %v803 = vrot.slane %v786, %v802
        %v804 = vlaneseq
        %v805 = vshrl.u32 %v804, 7
        %v806 = vsub.s32 4, %v805
        %v807 = vrot.slane %v786, %v806
        %v808 = vlaneseq
        %v809 = vshrl.u32 %v808, 7
        %v810 = vsub.s32 5, %v809
        %v811 = vrot.slane %v786, %v810
        %v812 = vlaneseq
        %v813 = vshrl.u32 %v812, 7
        %v814 = vsub.s32 6, %v813
        %v815 = vrot.slane %v786, %v814
        %v816 = vlaneseq
        %v817 = vshrl.u32 %v816, 7
        %v818 = vsub.s32 7, %v817
        %v819 = vrot.slane %v786, %v818
        %v828 = vsub.f32 %v645, %v791
        %v829 = vsub.f32 %v647, %v791
        %v830 = vsub.f32 %v649, %v795
        %v831 = vsub.f32 %v651, %v795
        %v832 = vsub.f32 %v653, %v799
        %v833 = vsub.f32 %v655, %v799
        %v834 = vsub.f32 %v657, %v803
        %v835 = vsub.f32 %v659, %v803
        %v836 = vsub.f32 %v661, %v807
        %v837 = vsub.f32 %v663, %v807
        %v838 = vsub.f32 %v665, %v811
        %v839 = vsub.f32 %v667, %v811
        %v840 = vsub.f32 %v669, %v815
        %v841 = vsub.f32 %v671, %v815
        %v842 = vsub.f32 %v673, %v819
        %v843 = vsub.f32 %v675, %v819
        %v844 = vmul.f32 %v828, 1.442695
        %v845 = vpow.pop %v844
        %v846 = vmul.f32 %v829, 1.442695
        %v847 = vpow.pop %v846
        %v848 = vmul.f32 %v830, 1.442695
        %v849 = vpow.pop %v848
        %v850 = vmul.f32 %v831, 1.442695
        %v851 = vpow.pop %v850
        %v852 = vmul.f32 %v832, 1.442695
        %v853 = vpow.pop %v852
        %v854 = vmul.f32 %v833, 1.442695
        %v855 = vpow.pop %v854
        %v856 = vmul.f32 %v834, 1.442695
        %v857 = vpow.pop %v856
        %v858 = vmul.f32 %v835, 1.442695
        %v859 = vpow.pop %v858
        %v860 = vmul.f32 %v836, 1.442695
        %v861 = vpow.pop %v860
        %v862 = vmul.f32 %v837, 1.442695
        %v863 = vpow.pop %v862
        %v864 = vmul.f32 %v838, 1.442695
        %v865 = vpow.pop %v864
        %v866 = vmul.f32 %v839, 1.442695
        %v867 = vpow.pop %v866
        %v868 = vmul.f32 %v840, 1.442695
        %v869 = vpow.pop %v868
        %v870 = vmul.f32 %v841, 1.442695
        %v871 = vpow.pop %v870
        %v872 = vmul.f32 %v842, 1.442695
        %v873 = vpow.pop %v872
        %v874 = vmul.f32 %v843, 1.442695
        %v875 = vpow.pop %v874
        %892 = vset.pattern.permute.xlu0 0
        %893 = vperm.xlu0 %892, %v845
        %v894 = vpop.permute.xlu0 %893
        %895 = vset.pattern.permute.xlu0 0
        %896 = vperm.xlu0 %895, %v847
        %v897 = vpop.permute.xlu0 %896
        %898 = vset.pattern.permute.xlu0 0
        %899 = vperm.xlu0 %898, %v849
        %v900 = vpop.permute.xlu0 %899
        %901 = vset.pattern.permute.xlu0 0
        %902 = vperm.xlu0 %901, %v851
        %v903 = vpop.permute.xlu0 %902
        %904 = vset.pattern.permute.xlu0 0
        %905 = vperm.xlu0 %904, %v853
        %v906 = vpop.permute.xlu0 %905
        %907 = vset.pattern.permute.xlu0 0
        %908 = vperm.xlu0 %907, %v855
        %v909 = vpop.permute.xlu0 %908
        %910 = vset.pattern.permute.xlu0 0
        %911 = vperm.xlu0 %910, %v857
        %v912 = vpop.permute.xlu0 %911
        %913 = vset.pattern.permute.xlu0 0
        %914 = vperm.xlu0 %913, %v859
        %v915 = vpop.permute.xlu0 %914
        %916 = vset.pattern.permute.xlu0 0
        %917 = vperm.xlu0 %916, %v861
        %v918 = vpop.permute.xlu0 %917
        %919 = vset.pattern.permute.xlu0 0
        %920 = vperm.xlu0 %919, %v863
        %v921 = vpop.permute.xlu0 %920
        %922 = vset.pattern.permute.xlu0 0
        %923 = vperm.xlu0 %922, %v865
        %v924 = vpop.permute.xlu0 %923
        %925 = vset.pattern.permute.xlu0 0
        %926 = vperm.xlu0 %925, %v867
        %v927 = vpop.permute.xlu0 %926
        %928 = vset.pattern.permute.xlu0 0
        %929 = vperm.xlu0 %928, %v869
        %v930 = vpop.permute.xlu0 %929
        %931 = vset.pattern.permute.xlu0 0
        %932 = vperm.xlu0 %931, %v871
        %v933 = vpop.permute.xlu0 %932
        %934 = vset.pattern.permute.xlu0 0
        %935 = vperm.xlu0 %934, %v873
        %v936 = vpop.permute.xlu0 %935
        %937 = vset.pattern.permute.xlu0 0
        %938 = vperm.xlu0 %937, %v875
        %v939 = vpop.permute.xlu0 %938
        %v940 = vlaneseq
        %v941 = vshrl.u32 %v940, 7
        %v942 = vsub.s32 %v693, %v941
        %v943 = vrot.slane %v894, %v942
        %v944 = vlaneseq
        %v945 = vshrl.u32 %v944, 7
        %v946 = vsub.s32 %v698, %v945
        %v947 = vrot.slane %v897, %v946
        %v948 = vsel %vm703, %v947, %v943
        %v949 = vlaneseq
        %v950 = vshrl.u32 %v949, 7
        %v951 = vsub.s32 %v693, %v950
        %v952 = vrot.slane %v900, %v951
        %v953 = vlaneseq
        %v954 = vshrl.u32 %v953, 7
        %v955 = vsub.s32 %v698, %v954
        %v956 = vrot.slane %v903, %v955
        %v957 = vsel %vm703, %v956, %v952
        %v958 = vlaneseq
        %v959 = vshrl.u32 %v958, 7
        %v960 = vsub.s32 %v693, %v959
        %v961 = vrot.slane %v906, %v960
        %v962 = vlaneseq
        %v963 = vshrl.u32 %v962, 7
        %v964 = vsub.s32 %v698, %v963
        %v965 = vrot.slane %v909, %v964
        %v966 = vsel %vm703, %v965, %v961
        %v967 = vlaneseq
        %v968 = vshrl.u32 %v967, 7
        %v969 = vsub.s32 %v693, %v968
        %v970 = vrot.slane %v912, %v969
        %v971 = vlaneseq
        %v972 = vshrl.u32 %v971, 7
        %v973 = vsub.s32 %v698, %v972
        %v974 = vrot.slane %v915, %v973
        %v975 = vsel %vm703, %v974, %v970
        %v976 = vlaneseq
        %v977 = vshrl.u32 %v976, 7
        %v978 = vsub.s32 %v693, %v977
        %v979 = vrot.slane %v918, %v978
        %v980 = vlaneseq
        %v981 = vshrl.u32 %v980, 7
        %v982 = vsub.s32 %v698, %v981
        %v983 = vrot.slane %v921, %v982
        %v984 = vsel %vm703, %v983, %v979
        %v985 = vlaneseq
        %v986 = vshrl.u32 %v985, 7
        %v987 = vsub.s32 %v693, %v986
        %v988 = vrot.slane %v924, %v987
        %v989 = vlaneseq
        %v990 = vshrl.u32 %v989, 7
        %v991 = vsub.s32 %v698, %v990
        %v992 = vrot.slane %v927, %v991
        %v993 = vsel %vm703, %v992, %v988
        %v994 = vlaneseq
        %v995 = vshrl.u32 %v994, 7
        %v996 = vsub.s32 %v693, %v995
        %v997 = vrot.slane %v930, %v996
        %v998 = vlaneseq
        %v999 = vshrl.u32 %v998, 7
        %v1000 = vsub.s32 %v698, %v999
        %v1001 = vrot.slane %v933, %v1000
        %v1002 = vsel %vm703, %v1001, %v997
        %v1003 = vlaneseq
        %v1004 = vshrl.u32 %v1003, 7
        %v1005 = vsub.s32 %v693, %v1004
        %v1006 = vrot.slane %v936, %v1005
        %v1007 = vlaneseq
        %v1008 = vshrl.u32 %v1007, 7
        %v1009 = vsub.s32 %v698, %v1008
        %v1010 = vrot.slane %v939, %v1009
        %v1011 = vsel %vm703, %v1010, %v1006
        %v1012 = vsel %vm768, %v957, %v948
        %v1013 = vsel %vm770, %v966, %v1012
        %v1014 = vsel %vm772, %v975, %v1013
        %v1015 = vsel %vm774, %v984, %v1014
        %v1016 = vsel %vm776, %v993, %v1015
        %v1017 = vsel %vm778, %v1002, %v1016
        %v1018 = vsel %vm780, %v1011, %v1017
        %v1020 = vsel %vm783, %v1018, 0.0
        %1021 = vadd.xlane.f32.xlu0 %v1020
        %v1022 = vpop.xlane.xlu0 %1021
        %v1023 = vrcp.pop %v1022
        %v1025 = vlaneseq
        %v1026 = vshrl.u32 %v1025, 7
        %v1027 = vsub.s32 0, %v1026
        %v1028 = vrot.slane %v1023, %v1027
        %v1029 = vlaneseq
        %v1030 = vshrl.u32 %v1029, 7
        %v1031 = vsub.s32 1, %v1030
        %v1032 = vrot.slane %v1023, %v1031
        %v1033 = vlaneseq
        %v1034 = vshrl.u32 %v1033, 7
        %v1035 = vsub.s32 2, %v1034
        %v1036 = vrot.slane %v1023, %v1035
        %v1037 = vlaneseq
        %v1038 = vshrl.u32 %v1037, 7
        %v1039 = vsub.s32 3, %v1038
        %v1040 = vrot.slane %v1023, %v1039
        %v1041 = vlaneseq
        %v1042 = vshrl.u32 %v1041, 7
        %v1043 = vsub.s32 4, %v1042
        %v1044 = vrot.slane %v1023, %v1043
        %v1045 = vlaneseq
        %v1046 = vshrl.u32 %v1045, 7
        %v1047 = vsub.s32 5, %v1046
        %v1048 = vrot.slane %v1023, %v1047
        %v1049 = vlaneseq
        %v1050 = vshrl.u32 %v1049, 7
        %v1051 = vsub.s32 6, %v1050
        %v1052 = vrot.slane %v1023, %v1051
        %v1053 = vlaneseq
        %v1054 = vshrl.u32 %v1053, 7
        %v1055 = vsub.s32 7, %v1054
        %v1056 = vrot.slane %v1023, %v1055
        %v1065 = vmul.f32 %v845, %v1028
        %v1066 = vmul.f32 %v847, %v1028
        %v1067 = vmul.f32 %v849, %v1032
        %v1068 = vmul.f32 %v851, %v1032
        %v1069 = vmul.f32 %v853, %v1036
        %v1070 = vmul.f32 %v855, %v1036
        %v1071 = vmul.f32 %v857, %v1040
        %v1072 = vmul.f32 %v859, %v1040
        %v1073 = vmul.f32 %v861, %v1044
        %v1074 = vmul.f32 %v863, %v1044
        %v1075 = vmul.f32 %v865, %v1048
        %v1076 = vmul.f32 %v867, %v1048
        %v1077 = vmul.f32 %v869, %v1052
        %v1078 = vmul.f32 %v871, %v1052
        %v1079 = vmul.f32 %v873, %v1056
        %v1080 = vmul.f32 %v875, %v1056
        %1082 = vset.pattern.permute.xlu0 0
        %1083 = vperm.xlu0 %1082, %v1065
        %v1084 = vpop.permute.xlu0 %1083
        %1087 = vset.pattern.permute.xlu0 0
        %1088 = vperm.xlu0 %1087, %v1066
        %v1089 = vpop.permute.xlu0 %1088
        %1092 = vset.pattern.permute.xlu0 0
        %1093 = vperm.xlu0 %1092, %v1067
        %v1094 = vpop.permute.xlu0 %1093
        %1097 = vset.pattern.permute.xlu0 0
        %1098 = vperm.xlu0 %1097, %v1068
        %v1099 = vpop.permute.xlu0 %1098
        %1102 = vset.pattern.permute.xlu0 0
        %1103 = vperm.xlu0 %1102, %v1069
        %v1104 = vpop.permute.xlu0 %1103
        %1107 = vset.pattern.permute.xlu0 0
        %1108 = vperm.xlu0 %1107, %v1070
        %v1109 = vpop.permute.xlu0 %1108
        %1112 = vset.pattern.permute.xlu0 0
        %1113 = vperm.xlu0 %1112, %v1071
        %v1114 = vpop.permute.xlu0 %1113
        %1117 = vset.pattern.permute.xlu0 0
        %1118 = vperm.xlu0 %1117, %v1072
        %v1119 = vpop.permute.xlu0 %1118
        %1122 = vset.pattern.permute.xlu0 0
        %1123 = vperm.xlu0 %1122, %v1073
        %v1124 = vpop.permute.xlu0 %1123
        %1127 = vset.pattern.permute.xlu0 0
        %1128 = vperm.xlu0 %1127, %v1074
        %v1129 = vpop.permute.xlu0 %1128
        %1132 = vset.pattern.permute.xlu0 0
        %1133 = vperm.xlu0 %1132, %v1075
        %v1134 = vpop.permute.xlu0 %1133
        %1137 = vset.pattern.permute.xlu0 0
        %1138 = vperm.xlu0 %1137, %v1076
        %v1139 = vpop.permute.xlu0 %1138
        %1142 = vset.pattern.permute.xlu0 0
        %1143 = vperm.xlu0 %1142, %v1077
        %v1144 = vpop.permute.xlu0 %1143
        %1147 = vset.pattern.permute.xlu0 0
        %1148 = vperm.xlu0 %1147, %v1078
        %v1149 = vpop.permute.xlu0 %1148
        %1152 = vset.pattern.permute.xlu0 0
        %1153 = vperm.xlu0 %1152, %v1079
        %v1154 = vpop.permute.xlu0 %1153
        %1157 = vset.pattern.permute.xlu0 0
        %1158 = vperm.xlu0 %1157, %v1080
        %v1159 = vpop.permute.xlu0 %1158
        %v1161 = vmul.f32 %v1084, %v305
        %v1162 = vmul.f32 %v1084, %v306
        %v1163 = vmul.f32 %v1089, %v307
        %v1164 = vmul.f32 %v1089, %v308
        %v1165 = vmul.f32 %v1094, %v309
        %v1166 = vmul.f32 %v1094, %v310
        %v1167 = vmul.f32 %v1099, %v311
        %v1168 = vmul.f32 %v1099, %v312
        %v1169 = vmul.f32 %v1104, %v313
        %v1170 = vmul.f32 %v1104, %v314
        %v1171 = vmul.f32 %v1109, %v315
        %v1172 = vmul.f32 %v1109, %v316
        %v1173 = vmul.f32 %v1114, %v317
        %v1174 = vmul.f32 %v1114, %v318
        %v1175 = vmul.f32 %v1119, %v319
        %v1176 = vmul.f32 %v1119, %v320
        %v1177 = vmul.f32 %v1124, %v321
        %v1178 = vmul.f32 %v1124, %v322
        %v1179 = vmul.f32 %v1129, %v323
        %v1180 = vmul.f32 %v1129, %v324
        %v1181 = vmul.f32 %v1134, %v325
        %v1182 = vmul.f32 %v1134, %v326
        %v1183 = vmul.f32 %v1139, %v327
        %v1184 = vmul.f32 %v1139, %v328
        %v1185 = vmul.f32 %v1144, %v329
        %v1186 = vmul.f32 %v1144, %v330
        %v1187 = vmul.f32 %v1149, %v331
        %v1188 = vmul.f32 %v1149, %v332
        %v1189 = vmul.f32 %v1154, %v333
        %v1190 = vmul.f32 %v1154, %v334
        %v1191 = vmul.f32 %v1159, %v335
        %v1192 = vmul.f32 %v1159, %v336
        %v1193 = vadd.f32 %v1161, %v1163
        %v1194 = vrot.slane %v1193, 4
        %v1195 = vadd.f32 %v1193, %v1194
        %v1196 = vrot.slane %v1195, 2
        %v1197 = vadd.f32 %v1195, %v1196
        %v1198 = vrot.slane %v1197, 1
        %v1199 = vadd.f32 %v1197, %v1198
        %v1200 = vadd.f32 %v1162, %v1164
        %v1201 = vrot.slane %v1200, 4
        %v1202 = vadd.f32 %v1200, %v1201
        %v1203 = vrot.slane %v1202, 2
        %v1204 = vadd.f32 %v1202, %v1203
        %v1205 = vrot.slane %v1204, 1
        %v1206 = vadd.f32 %v1204, %v1205
        %v1207 = vadd.f32 %v1165, %v1167
        %v1208 = vrot.slane %v1207, 4
        %v1209 = vadd.f32 %v1207, %v1208
        %v1210 = vrot.slane %v1209, 2
        %v1211 = vadd.f32 %v1209, %v1210
        %v1212 = vrot.slane %v1211, 1
        %v1213 = vadd.f32 %v1211, %v1212
        %v1214 = vadd.f32 %v1166, %v1168
        %v1215 = vrot.slane %v1214, 4
        %v1216 = vadd.f32 %v1214, %v1215
        %v1217 = vrot.slane %v1216, 2
        %v1218 = vadd.f32 %v1216, %v1217
        %v1219 = vrot.slane %v1218, 1
        %v1220 = vadd.f32 %v1218, %v1219
        %v1221 = vadd.f32 %v1169, %v1171
        %v1222 = vrot.slane %v1221, 4
        %v1223 = vadd.f32 %v1221, %v1222
        %v1224 = vrot.slane %v1223, 2
        %v1225 = vadd.f32 %v1223, %v1224
        %v1226 = vrot.slane %v1225, 1
        %v1227 = vadd.f32 %v1225, %v1226
        %v1228 = vadd.f32 %v1170, %v1172
        %v1229 = vrot.slane %v1228, 4
        %v1230 = vadd.f32 %v1228, %v1229
        %v1231 = vrot.slane %v1230, 2
        %v1232 = vadd.f32 %v1230, %v1231
        %v1233 = vrot.slane %v1232, 1
        %v1234 = vadd.f32 %v1232, %v1233
        %v1235 = vadd.f32 %v1173, %v1175
        %v1236 = vrot.slane %v1235, 4
        %v1237 = vadd.f32 %v1235, %v1236
        %v1238 = vrot.slane %v1237, 2
        %v1239 = vadd.f32 %v1237, %v1238
        %v1240 = vrot.slane %v1239, 1
        %v1241 = vadd.f32 %v1239, %v1240
        %v1242 = vadd.f32 %v1174, %v1176
        %v1243 = vrot.slane %v1242, 4
        %v1244 = vadd.f32 %v1242, %v1243
        %v1245 = vrot.slane %v1244, 2
        %v1246 = vadd.f32 %v1244, %v1245
        %v1247 = vrot.slane %v1246, 1
        %v1248 = vadd.f32 %v1246, %v1247
        %v1249 = vadd.f32 %v1177, %v1179
        %v1250 = vrot.slane %v1249, 4
        %v1251 = vadd.f32 %v1249, %v1250
        %v1252 = vrot.slane %v1251, 2
        %v1253 = vadd.f32 %v1251, %v1252
        %v1254 = vrot.slane %v1253, 1
        %v1255 = vadd.f32 %v1253, %v1254
        %v1256 = vadd.f32 %v1178, %v1180
        %v1257 = vrot.slane %v1256, 4
        %v1258 = vadd.f32 %v1256, %v1257
        %v1259 = vrot.slane %v1258, 2
        %v1260 = vadd.f32 %v1258, %v1259
        %v1261 = vrot.slane %v1260, 1
        %v1262 = vadd.f32 %v1260, %v1261
        %v1263 = vadd.f32 %v1181, %v1183
        %v1264 = vrot.slane %v1263, 4
        %v1265 = vadd.f32 %v1263, %v1264
        %v1266 = vrot.slane %v1265, 2
        %v1267 = vadd.f32 %v1265, %v1266
        %v1268 = vrot.slane %v1267, 1
        %v1269 = vadd.f32 %v1267, %v1268
        %v1270 = vadd.f32 %v1182, %v1184
        %v1271 = vrot.slane %v1270, 4
        %v1272 = vadd.f32 %v1270, %v1271
        %v1273 = vrot.slane %v1272, 2
        %v1274 = vadd.f32 %v1272, %v1273
        %v1275 = vrot.slane %v1274, 1
        %v1276 = vadd.f32 %v1274, %v1275
        %v1277 = vadd.f32 %v1185, %v1187
        %v1278 = vrot.slane %v1277, 4
        %v1279 = vadd.f32 %v1277, %v1278
        %v1280 = vrot.slane %v1279, 2
        %v1281 = vadd.f32 %v1279, %v1280
        %v1282 = vrot.slane %v1281, 1
        %v1283 = vadd.f32 %v1281, %v1282
        %v1284 = vadd.f32 %v1186, %v1188
        %v1285 = vrot.slane %v1284, 4
        %v1286 = vadd.f32 %v1284, %v1285
        %v1287 = vrot.slane %v1286, 2
        %v1288 = vadd.f32 %v1286, %v1287
        %v1289 = vrot.slane %v1288, 1
        %v1290 = vadd.f32 %v1288, %v1289
        %v1291 = vadd.f32 %v1189, %v1191
        %v1292 = vrot.slane %v1291, 4
        %v1293 = vadd.f32 %v1291, %v1292
        %v1294 = vrot.slane %v1293, 2
        %v1295 = vadd.f32 %v1293, %v1294
        %v1296 = vrot.slane %v1295, 1
        %v1297 = vadd.f32 %v1295, %v1296
        %v1298 = vadd.f32 %v1190, %v1192
        %v1299 = vrot.slane %v1298, 4
        %v1300 = vadd.f32 %v1298, %v1299
        %v1301 = vrot.slane %v1300, 2
        %v1302 = vadd.f32 %v1300, %v1301
        %v1303 = vrot.slane %v1302, 1
        %v1304 = vadd.f32 %v1302, %v1303
        %v1321 = vsel %vm768, %v1213, %v1199
        %v1322 = vsel %vm770, %v1227, %v1321
        %v1323 = vsel %vm772, %v1241, %v1322
        %v1324 = vsel %vm774, %v1255, %v1323
        %v1325 = vsel %vm776, %v1269, %v1324
        %v1326 = vsel %vm778, %v1283, %v1325
        %v1327 = vsel %vm780, %v1297, %v1326
        %v1328 = vsel %vm768, %v1220, %v1206
        %v1329 = vsel %vm770, %v1234, %v1328
        %v1330 = vsel %vm772, %v1248, %v1329
        %v1331 = vsel %vm774, %v1262, %v1330
        %v1332 = vsel %vm776, %v1276, %v1331
        %v1333 = vsel %vm778, %v1290, %v1332
        %v1334 = vsel %vm780, %v1304, %v1333
        %1337 = vst [vmem:[%s296] sm:$0xff] %v1327
        %1338 = vst [vmem:[%s296 + $0x8] sm:$0xff] %v1334
        %v1339 = vlaneseq
        %v1340 = vshrl.u32 %v1339, 7
        %v1341 = vsub.s32 %v693, %v1340
        %v1342 = vrot.slane %v1084, %v1341
        %v1343 = vlaneseq
        %v1344 = vshrl.u32 %v1343, 7
        %v1345 = vsub.s32 %v698, %v1344
        %v1346 = vrot.slane %v1089, %v1345
        %v1347 = vsel %vm703, %v1346, %v1342
        %v1348 = vlaneseq
        %v1349 = vshrl.u32 %v1348, 7
        %v1350 = vsub.s32 %v693, %v1349
        %v1351 = vrot.slane %v1094, %v1350
        %v1352 = vlaneseq
        %v1353 = vshrl.u32 %v1352, 7
        %v1354 = vsub.s32 %v698, %v1353
        %v1355 = vrot.slane %v1099, %v1354
        %v1356 = vsel %vm703, %v1355, %v1351
        %v1357 = vlaneseq
        %v1358 = vshrl.u32 %v1357, 7
        %v1359 = vsub.s32 %v693, %v1358
        %v1360 = vrot.slane %v1104, %v1359
        %v1361 = vlaneseq
        %v1362 = vshrl.u32 %v1361, 7
        %v1363 = vsub.s32 %v698, %v1362
        %v1364 = vrot.slane %v1109, %v1363
        %v1365 = vsel %vm703, %v1364, %v1360
        %v1366 = vlaneseq
        %v1367 = vshrl.u32 %v1366, 7
        %v1368 = vsub.s32 %v693, %v1367
        %v1369 = vrot.slane %v1114, %v1368
        %v1370 = vlaneseq
        %v1371 = vshrl.u32 %v1370, 7
        %v1372 = vsub.s32 %v698, %v1371
        %v1373 = vrot.slane %v1119, %v1372
        %v1374 = vsel %vm703, %v1373, %v1369
        %v1375 = vlaneseq
        %v1376 = vshrl.u32 %v1375, 7
        %v1377 = vsub.s32 %v693, %v1376
        %v1378 = vrot.slane %v1124, %v1377
        %v1379 = vlaneseq
        %v1380 = vshrl.u32 %v1379, 7
        %v1381 = vsub.s32 %v698, %v1380
        %v1382 = vrot.slane %v1129, %v1381
        %v1383 = vsel %vm703, %v1382, %v1378
        %v1384 = vlaneseq
        %v1385 = vshrl.u32 %v1384, 7
        %v1386 = vsub.s32 %v693, %v1385
        %v1387 = vrot.slane %v1134, %v1386
        %v1388 = vlaneseq
        %v1389 = vshrl.u32 %v1388, 7
        %v1390 = vsub.s32 %v698, %v1389
        %v1391 = vrot.slane %v1139, %v1390
        %v1392 = vsel %vm703, %v1391, %v1387
        %v1393 = vlaneseq
        %v1394 = vshrl.u32 %v1393, 7
        %v1395 = vsub.s32 %v693, %v1394
        %v1396 = vrot.slane %v1144, %v1395
        %v1397 = vlaneseq
        %v1398 = vshrl.u32 %v1397, 7
        %v1399 = vsub.s32 %v698, %v1398
        %v1400 = vrot.slane %v1149, %v1399
        %v1401 = vsel %vm703, %v1400, %v1396
        %v1402 = vlaneseq
        %v1403 = vshrl.u32 %v1402, 7
        %v1404 = vsub.s32 %v693, %v1403
        %v1405 = vrot.slane %v1154, %v1404
        %v1406 = vlaneseq
        %v1407 = vshrl.u32 %v1406, 7
        %v1408 = vsub.s32 %v698, %v1407
        %v1409 = vrot.slane %v1159, %v1408
        %v1410 = vsel %vm703, %v1409, %v1405
        %v1411 = vsel %vm768, %v1356, %v1347
        %v1412 = vsel %vm770, %v1365, %v1411
        %v1413 = vsel %vm772, %v1374, %v1412
        %v1414 = vsel %vm774, %v1383, %v1413
        %v1415 = vsel %vm776, %v1392, %v1414
        %v1416 = vsel %vm778, %v1401, %v1415
        %v1417 = vsel %vm780, %v1410, %v1416
        %1419 = vst.msk [vmem:[%s303] sm:$0xff] %vm783, %v1417
        %s1420 = sand.u32 %s129, 1
        %s1421 = scalar_lea.sflag [#allocation4], %s1420
        %s1422 = sand.u32 %s129, 1
        %s1423 = smul.addr %s1422, 16
        %s1424 = scalar_lea.vmem [#allocation8], %s1423
        %s1425 = sand.u32 %s155, 1
        %s1426 = scalar_lea.sflag [#allocation10], %s1425
        %s1427 = sand.u32 %s155, 1
        %s1428 = smul.addr %s1427, 8
        %s1429 = scalar_lea.vmem [#allocation9], %s1428
        // Predicated region
        $region49: #{tpu_custom_call.1} parent=35 // pred_check
          %p1430 = pneg %p139
        $region50: #{tpu_custom_call.1} parent=35 // pred_check_branch
          %1432 = sbr.rel (%p1430) target = $region52
        $region51: #{tpu_custom_call.1} parent=35 // pred_region
          %s1434 = ssub.s32 256, 256
          %1435 = vsyncadd %s1421, %s1434
          %s1436 = smul.addr %s27, 2
          %s1437 = smul.addr %s1436, 128
          %s1438 = scalar_lea.hbm %s4, %s1437
          %s1440 = sshll.u32 %s1424, 4
          %s1441 = int_to_ptr.vmem [resolvable:$true] %s1440
          %1443 = dma.vmem_to_hbm [thread:$0]  %s1441, 256, %s1438, %s1421
        $region52: #{tpu_custom_call.1} parent=35 // pred_fallthru
          _
        // Predicated region
        $region53: #{tpu_custom_call.1} parent=35 // pred_check
          %p1444 = pneg %p165
        $region54: #{tpu_custom_call.1} parent=35 // pred_check_branch
          %1446 = sbr.rel (%p1444) target = $region56
        $region55: #{tpu_custom_call.1} parent=35 // pred_region
          %s1448 = ssub.s32 128, 128
          %1449 = vsyncadd %s1426, %s1448
          %s1450 = smul.addr %s27, 128
          %s1451 = scalar_lea.hbm %s5, %s1450
          %s1453 = sshll.u32 %s1429, 4
          %s1454 = int_to_ptr.vmem [resolvable:$true] %s1453
          %1456 = dma.vmem_to_hbm [thread:$0]  %s1454, 128, %s1451, %s1426
        $region56: #{tpu_custom_call.1} parent=35 // pred_fallthru
          _
      $region36: #{tpu_custom_call.1} parent=5 // pred_fallthru
        _
      %p1457 = scmp.le.s32.totalorder 2, %s22
      // Predicated region
      $region57: #{tpu_custom_call.1} parent=5 // pred_check
        %p1458 = pneg %p1457
      $region58: #{tpu_custom_call.1} parent=5 // pred_check_branch
        %1460 = sbr.rel (%p1458) target = $region60
      $region59: #{tpu_custom_call.1} parent=5 // pred_region
        %s1461 = ssub.s32 %s22, 2
        // Predicated region
        $region61: #{tpu_custom_call.1} parent=59 // pred_check
          %p1462 = pneg %p145
        $region62: #{tpu_custom_call.1} parent=59 // pred_check_branch
          %1464 = sbr.rel (%p1462) target = $region64
        $region63: #{tpu_custom_call.1} parent=59 // pred_region
          %s1465 = sand.u32 %s130, 1
          %s1466 = scalar_lea.sflag [#allocation4], %s1465
          %s1467 = sand.u32 %s130, 1
          %s1468 = smul.addr %s1467, 16
          %s1469 = scalar_lea.vmem [#allocation8], %s1468
          %1470 = dma.done %s1466, 256
        $region64: #{tpu_custom_call.1} parent=59 // pred_fallthru
          _
        // Predicated region
        $region65: #{tpu_custom_call.1} parent=59 // pred_check
          %p1471 = pneg %p171
        $region66: #{tpu_custom_call.1} parent=59 // pred_check_branch
          %1473 = sbr.rel (%p1471) target = $region68
        $region67: #{tpu_custom_call.1} parent=59 // pred_region
          %s1474 = sand.u32 %s156, 1
          %s1475 = scalar_lea.sflag [#allocation10], %s1474
          %s1476 = sand.u32 %s156, 1
          %s1477 = smul.addr %s1476, 8
          %s1478 = scalar_lea.vmem [#allocation9], %s1477
          %1479 = dma.done %s1475, 128
        $region68: #{tpu_custom_call.1} parent=59 // pred_fallthru
          _
      $region60: #{tpu_custom_call.1} parent=5 // pred_fallthru
        _
    $region6: #{tpu_custom_call.1} parent=1 // loop_footer
      %s26 = sadd.s32 1, %s22
    $region7: #{tpu_custom_call.1} parent=1 // loop_footer_branch
      %21 = sbr.rel target = $region3
    $region8: #{tpu_custom_call.1} parent=1 // loop_exit
      _
    %1480 = vsyncpa [#allocation3], 1
    %s1481 = scalar_lea.sflag [#allocation3], 1
    %1482 = vsyncpa %s1481, 1
    %1483 = vsyncpa [#allocation6], 1
    %1484 = vsyncpa [#allocation4], 1
    %s1485 = scalar_lea.sflag [#allocation4], 1
    %1486 = vsyncpa %s1485, 1
    %1487 = vsyncpa [#allocation10], 1
    %s1488 = scalar_lea.sflag [#allocation10], 1
    %1489 = vsyncpa %s1488, 1

</llo_original>
